<compile_context>
chip_gen: v6e
topology: v6e:2x2x1
jax: 0.10.0
libtpu: 0.0.40
codegen_flags: <defaults>
</compile_context>

<pallas_src>
import jax
import jax.numpy as jnp
from jax.experimental import pallas as pl
from jax.experimental.pallas import tpu as pltpu


# ----------------------------------------------------------------------------
# Kernel: fused squeeze -> excite -> scale for a (Bb, C, HW) slab of images
# ----------------------------------------------------------------------------
def se_layer_kernel(x_ref, w1t_ref, w2t_ref, o_ref):
    # x_ref / o_ref : (Bb, C, HW)   w1t_ref : (C, Cr)   w2t_ref : (Cr, C)
    hw = x_ref.shape[-1]

    # Squeeze: global average pool over the spatial (lane) axis, accumulated in f32.
    # Only the small (Bb, C) pooled matrix is materialized — no full-block f32 temp.
    pooled = jnp.sum(x_ref[...], axis=-1, dtype=jnp.float32) * jnp.float32(1.0 / hw)

    # Excite (batched over the Bb images in this block), all in f32:
    #   Linear(C -> Cr, no bias) + ReLU, Linear(Cr -> C, no bias) + sigmoid.
    h = jnp.maximum(
        jnp.dot(pooled, w1t_ref[...].astype(jnp.float32),
                preferred_element_type=jnp.float32), 0.0)          # (Bb, Cr)
    s = jax.nn.sigmoid(
        jnp.dot(h, w2t_ref[...].astype(jnp.float32),
                preferred_element_type=jnp.float32))               # (Bb, C)

    # Scale: per-channel gate broadcast over the lane (HW) axis, multiplied directly
    # in the activation dtype (keeps bf16 runs on the bf16 VALU, no f32 block temp).
    gate = s.astype(o_ref.dtype)[:, :, None]                        # (Bb, C, 1)
    o_ref[...] = (x_ref[...] * gate).astype(o_ref.dtype)


# ----------------------------------------------------------------------------
# Block-size / VMEM-budget helpers
# ----------------------------------------------------------------------------
def _vmem_capacity_bytes():
    try:
        return int(pltpu.get_tpu_info().vmem_capacity_bytes)
    except Exception:
        return 64 * 1024 * 1024  # conservative fallback (v7x per-TC VMEM)


def _pick_block_batch(B, C, HW, itemsize, vmem_bytes):
    """Pick how many images go into one grid step."""
    # Per image-slab: double-buffered input block + double-buffered output block.
    per_image = 4 * C * HW * itemsize
    # Leave ~half of VMEM for weights, f32 temps and compiler-internal scratch.
    budget = vmem_bytes // 2
    bb = max(1, min(B, budget // max(per_image, 1)))
    # Keep the grid >= 2 steps so both v7x TensorCores get work (free on v5e/v6e).
    if B >= 2:
        bb = min(bb, max(1, B // 2))
    # Avoid a ragged tail block: shrink to a divisor of B.
    while B % bb != 0:
        bb -= 1
    return bb


# ----------------------------------------------------------------------------
# Wrapper
# ----------------------------------------------------------------------------
def se_layer(x, w1, w2):
    """x: (B, C, H, W) NCHW;  w1: (C//r, C);  w2: (C, C//r)  (nn.Linear weight layout)."""
    B, C, H, W = x.shape
    HW = H * W
    # Channels on sublanes, flattened spatial on lanes.  We intentionally do NOT add a
    # wrapper transpose to force C onto lanes for odd HW — the extra HBM pass would
    # cost more than the masked stores it avoids.
    x2 = x.reshape(B, C, HW)

    # Pre-transpose the tiny weights once on the host so the in-kernel matmuls are
    # plain row-major (Bb, C) @ (C, Cr) and (Bb, Cr) @ (Cr, C).
    w1t = w1.T  # (C, Cr)
    w2t = w2.T  # (Cr, C)
    Cr = w1t.shape[1]

    itemsize = jnp.dtype(x.dtype).itemsize
    vmem_cap = _vmem_capacity_bytes()
    bb = _pick_block_batch(B, C, HW, itemsize, vmem_cap)
    block_bytes = 4 * bb * C * HW * itemsize
    vmem_limit = int(min(vmem_cap, max(32 << 20, block_bytes + (8 << 20))))

    out = pl.pallas_call(
        se_layer_kernel,
        out_shape=jax.ShapeDtypeStruct((B, C, HW), x.dtype),
        grid=(B // bb,),
        in_specs=[
            pl.BlockSpec((bb, C, HW), lambda b: (b, 0, 0)),
            pl.BlockSpec((C, Cr), lambda b: (0, 0)),
            pl.BlockSpec((Cr, C), lambda b: (0, 0)),
        ],
        out_specs=pl.BlockSpec((bb, C, HW), lambda b: (b, 0, 0)),
        compiler_params=pltpu.CompilerParams(
            dimension_semantics=("parallel",),
            vmem_limit_bytes=vmem_limit,
        ),
    )(x2, w1t, w2t)
    return out.reshape(B, C, H, W)


# ----------------------------------------------------------------------------
# Pure-JAX reference (mirrors the PyTorch SELayer forward exactly)
# ----------------------------------------------------------------------------
def reference_se_layer(x, w1, w2):
    y = jnp.mean(x, axis=(2, 3))                 # avg_pool -> (B, C)
    y = jax.nn.relu(y @ w1.T)                    # Linear(C, C//r, bias=False) + ReLU
    y = jax.nn.sigmoid(y @ w2.T)                 # Linear(C//r, C, bias=False) + Sigmoid
    return x * y[:, :, None, None]               # x * y.expand_as(x)


if __name__ == "__main__":
    # SELayer(channel=64, reduction=16): channel // reduction = 4
    B, C, H, W = 2, 64, 16, 16
    reduction = 16
    Cr = C // reduction

    key = jax.random.PRNGKey(0)
    kx, k1, k2 = jax.random.split(key, 3)
    x = jax.random.normal(kx, (B, C, H, W), jnp.float32)
    w1 = jax.random.normal(k1, (Cr, C), jnp.float32) * 0.1   # nn.Linear(C, Cr).weight
    w2 = jax.random.normal(k2, (C, Cr), jnp.float32) * 0.1   # nn.Linear(Cr, C).weight

    out = jax.jit(se_layer)(x, w1, w2)
    out = jax.block_until_ready(out)
    assert out.shape == (B, C, H, W), out.shape

    ref = reference_se_layer(x, w1, w2)
    err = float(jnp.max(jnp.abs(out - ref)))
    assert err < 1e-5, f"max abs err {err}"
    print("KERNEL_OK")
</pallas_src>

<mosaic_0001>
module attributes {stable_mosaic.version = 11 : i64} {
  func.func @se_layer_kernel(%arg0: i32, %arg1: memref<1x64x256xf32, #tpu.memory_space<vmem>>, %arg2: memref<64x4xf32, #tpu.memory_space<vmem>>, %arg3: memref<4x64xf32, #tpu.memory_space<vmem>>, %arg4: memref<1x64x256xf32, #tpu.memory_space<vmem>>) attributes {dimension_semantics = [#tpu.dimension_semantics<parallel>], iteration_bounds = array<i64: 2>, scalar_prefetch = 0 : i64, scratch_operands = 0 : i64, tpu.core_type = #tpu.core_type<tc>, window_params = [{transform_indices = @transform_0, window_bounds = array<i64: 1, 64, 256>}, {pipeline_mode = #tpu.pipeline_mode<synchronous>, transform_indices = @transform_1, window_bounds = array<i64: 64, 4>}, {pipeline_mode = #tpu.pipeline_mode<synchronous>, transform_indices = @transform_2, window_bounds = array<i64: 4, 64>}, {transform_indices = @transform_3, window_bounds = array<i64: 1, 64, 256>}]} {
    %c0 = arith.constant 0 : index
    %c0_0 = arith.constant 0 : index
    %c0_1 = arith.constant 0 : index
    %0 = vector.load %arg1[%c0, %c0_0, %c0_1] : memref<1x64x256xf32, #tpu.memory_space<vmem>>, vector<1x64x256xf32>
    %cst = arith.constant dense<0.000000e+00> : vector<1x64xf32>
    %1 = vector.multi_reduction <add>, %0, %cst [2] : vector<1x64x256xf32> to vector<1x64xf32>
    %cst_2 = arith.constant 3.906250e-03 : f32
    %2 = vector.broadcast %cst_2 : f32 to vector<1x64xf32>
    %3 = arith.mulf %1, %2 : vector<1x64xf32>
    %c0_3 = arith.constant 0 : index
    %c0_4 = arith.constant 0 : index
    %4 = vector.load %arg2[%c0_3, %c0_4] : memref<64x4xf32, #tpu.memory_space<vmem>>, vector<64x4xf32>
    %cst_5 = arith.constant dense<0.000000e+00> : vector<1x4xf32>
    %5 = tpu.matmul %3, %4, %cst_5 {dimension_numbers = #tpu.dot_dimension_numbers<[1], [0], [0], [1], [0, 0, 1, 1], [], []>} : vector<1x64xf32>, vector<64x4xf32>, vector<1x4xf32> -> vector<1x4xf32>
    %cst_6 = arith.constant 0.000000e+00 : f32
    %6 = vector.broadcast %cst_6 : f32 to vector<1x4xf32>
    %7 = arith.maximumf %5, %6 : vector<1x4xf32>
    %c0_7 = arith.constant 0 : index
    %c0_8 = arith.constant 0 : index
    %8 = vector.load %arg3[%c0_7, %c0_8] : memref<4x64xf32, #tpu.memory_space<vmem>>, vector<4x64xf32>
    %cst_9 = arith.constant dense<0.000000e+00> : vector<1x64xf32>
    %9 = tpu.matmul %7, %8, %cst_9 {dimension_numbers = #tpu.dot_dimension_numbers<[1], [0], [0], [1], [0, 0, 1, 1], [], []>} : vector<1x4xf32>, vector<4x64xf32>, vector<1x64xf32> -> vector<1x64xf32>
    %10 = arith.negf %9 : vector<1x64xf32>
    %11 = math.exp %10 : vector<1x64xf32>
    %cst_10 = arith.constant 1.000000e+00 : f32
    %12 = vector.broadcast %cst_10 : f32 to vector<1x64xf32>
    %13 = arith.addf %12, %11 : vector<1x64xf32>
    %14 = arith.divf %12, %13 : vector<1x64xf32>
    %15 = vector.shape_cast %14 : vector<1x64xf32> to vector<1x64x1xf32>
    %c0_11 = arith.constant 0 : index
    %c0_12 = arith.constant 0 : index
    %c0_13 = arith.constant 0 : index
    %16 = vector.load %arg1[%c0_11, %c0_12, %c0_13] : memref<1x64x256xf32, #tpu.memory_space<vmem>>, vector<1x64x256xf32>
    %17 = vector.broadcast %15 : vector<1x64x1xf32> to vector<1x64x256xf32>
    %18 = arith.mulf %16, %17 : vector<1x64x256xf32>
    %c0_14 = arith.constant 0 : index
    %c0_15 = arith.constant 0 : index
    %c0_16 = arith.constant 0 : index
    %19 = vector.load %arg4[%c0_14, %c0_15, %c0_16] : memref<1x64x256xf32, #tpu.memory_space<vmem>>, vector<1x64x256xf32>
    tpu.vector_store %arg4[%c0_14, %c0_15, %c0_16], %18 {strides = array<i32>} : memref<1x64x256xf32, #tpu.memory_space<vmem>>, vector<1x64x256xf32>,
    return
  }
  func.func @transform_0(%arg0: i32) -> (i32, i32, i32) {
    %c0_i32 = arith.constant 0 : i32
    %c0_i32_0 = arith.constant 0 : i32
    %c0_i32_1 = arith.constant 0 : i32
    return %arg0, %c0_i32, %c0_i32_0 : i32, i32, i32
  }
  func.func @transform_1(%arg0: i32) -> (i32, i32) {
    %c0_i32 = arith.constant 0 : i32
    %c0_i32_0 = arith.constant 0 : i32
    %c0_i32_1 = arith.constant 0 : i32
    return %c0_i32, %c0_i32_0 : i32, i32
  }
  func.func @transform_2(%arg0: i32) -> (i32, i32) {
    %c0_i32 = arith.constant 0 : i32
    %c0_i32_0 = arith.constant 0 : i32
    %c0_i32_1 = arith.constant 0 : i32
    return %c0_i32, %c0_i32_0 : i32, i32
  }
  func.func @transform_3(%arg0: i32) -> (i32, i32, i32) {
    %c0_i32 = arith.constant 0 : i32
    %c0_i32_0 = arith.constant 0 : i32
    %c0_i32_1 = arith.constant 0 : i32
    return %arg0, %c0_i32, %c0_i32_0 : i32, i32, i32
  }
}

</mosaic_0001>

<llo_original>
// kernel: se_layer.1
$region0: #{se_layer.1}
  #allocation0 [shape = 'u32[]', space=smem, size = 0x4, offset = 0x4, fixed_abs, tag = 'smem constant byte address 0x4 - core index']
  #allocation1 [shape = 'u32[144,128]{1,0:T(1,128)}', space=vmem, size = 0x12000, scoped, tag = 'internal scratch']
  %s0 = inlined_call_operand.vmem [shape: f32[2,64,256], index: 0, kind: input, shape index: {}]
  %s1 = inlined_call_operand.vmem [shape: f32[64,4], index: 1, kind: input, shape index: {}]
  %s2 = inlined_call_operand.vmem [shape: f32[4,64], index: 2, kind: input, shape index: {}]
  %s3 = inlined_call_operand.vmem [shape: f32[2,64,256], index: 3, kind: output, shape index: {}]
  %s4 = sld [smem:[#allocation0]]
  $region45: #{se_layer.1} parent=0
    _
  %s6 = ssub.s32 1, %s4
  %s7 = scalar_select 0, %s6, %s4
  loop: start=0, step=1, limit=4
  $region2: #{se_layer.1} parent=0 // loop_pre_header
    _
  $region3: #{se_layer.1} parent=0 // loop_header
    %s9 = sphi 0, %s13
    %p10 = scmp.ge.s32.totalorder %s9, 4
    %s19 = sphi 0, %s21
    %s22 = sphi 0, %s19
    %s23 = sphi 0, %s22
    %s39 = sphi 0, %s23
    %s43 = sphi 0, %s43
    %s45 = sphi 0, %s43
    %s46 = sphi 0, %s45
    %s60 = sphi 0, %s46
    %s64 = sphi 0, %s64
    %s66 = sphi 0, %s64
    %s67 = sphi 0, %s66
    %s81 = sphi 0, %s67
    %s87 = sphi 0, %s89
    %s90 = sphi 0, %s87
    %s91 = sphi 0, %s90
    %s107 = sphi 0, %s91
  $region4: #{se_layer.1} parent=0 // loop_header_branch
    %12 = sbr.rel (%p10) target = $region8
  $region5: #{se_layer.1} parent=0 // loop_body
    %s14 = ssub.s32 %s9, 1
    %s15 = ssub.s32 %s9, 2
    %s16 = sadd.s32 %s9, 1
    %s17 = ssub.s32 %s9, %s16
    %p18 = scmp.eq.s32.totalorder %s17, 0
    %s20 = sadd.s32 %s19, 1
    %s21 = scalar_select %p18, %s19, %s20
    %p24 = pneg %p18
    %p25 = scmp.eq.s32.totalorder %s9, 1
    %p26 = por %p24, %p25
    %p27 = scmp.ne.s32.totalorder %s19, %s22
    %p28 = scmp.eq.s32.totalorder %s9, 0
    %p29 = por %p27, %p28
    %p30 = scmp.ne.s32.totalorder %s19, %s22
    %p31 = scmp.eq.s32.totalorder %s14, 1
    %p32 = por %p30, %p31
    %p33 = scmp.ne.s32.totalorder %s22, %s23
    %p34 = scmp.eq.s32.totalorder %s14, 0
    %p35 = por %p33, %p34
    %p36 = scmp.ne.s32.totalorder %s22, %s23
    %p37 = scmp.eq.s32.totalorder %s15, 1
    %p38 = por %p36, %p37
    %p40 = scmp.ne.s32.totalorder %s23, %s39
    %p41 = scmp.eq.s32.totalorder %s15, 0
    %p42 = por %p40, %p41
    %s44 = sadd.s32 %s43, 1
    %p47 = scmp.eq.s32.totalorder %s9, 1
    %p48 = scmp.ne.s32.totalorder %s43, %s45
    %p49 = scmp.eq.s32.totalorder %s9, 0
    %p50 = por %p48, %p49
    %p51 = scmp.ne.s32.totalorder %s43, %s45
    %p52 = scmp.eq.s32.totalorder %s14, 1
    %p53 = por %p51, %p52
    %p54 = scmp.ne.s32.totalorder %s45, %s46
    %p55 = scmp.eq.s32.totalorder %s14, 0
    %p56 = por %p54, %p55
    %p57 = scmp.ne.s32.totalorder %s45, %s46
    %p58 = scmp.eq.s32.totalorder %s15, 1
    %p59 = por %p57, %p58
    %p61 = scmp.ne.s32.totalorder %s46, %s60
    %p62 = scmp.eq.s32.totalorder %s15, 0
    %p63 = por %p61, %p62
    %s65 = sadd.s32 %s64, 1
    %p68 = scmp.eq.s32.totalorder %s9, 1
    %p69 = scmp.ne.s32.totalorder %s64, %s66
    %p70 = scmp.eq.s32.totalorder %s9, 0
    %p71 = por %p69, %p70
    %p72 = scmp.ne.s32.totalorder %s64, %s66
    %p73 = scmp.eq.s32.totalorder %s14, 1
    %p74 = por %p72, %p73
    %p75 = scmp.ne.s32.totalorder %s66, %s67
    %p76 = scmp.eq.s32.totalorder %s14, 0
    %p77 = por %p75, %p76
    %p78 = scmp.ne.s32.totalorder %s66, %s67
    %p79 = scmp.eq.s32.totalorder %s15, 1
    %p80 = por %p78, %p79
    %p82 = scmp.ne.s32.totalorder %s67, %s81
    %p83 = scmp.eq.s32.totalorder %s15, 0
    %p84 = por %p82, %p83
    %s85 = ssub.s32 %s9, %s16
    %p86 = scmp.eq.s32.totalorder %s85, 0
    %s88 = sadd.s32 %s87, 1
    %s89 = scalar_select %p86, %s87, %s88
    %p92 = pneg %p86
    %p93 = scmp.eq.s32.totalorder %s9, 1
    %p94 = por %p92, %p93
    %p95 = scmp.ne.s32.totalorder %s87, %s90
    %p96 = scmp.eq.s32.totalorder %s9, 0
    %p97 = por %p95, %p96
    %p98 = scmp.ne.s32.totalorder %s87, %s90
    %p99 = scmp.eq.s32.totalorder %s14, 1
    %p100 = por %p98, %p99
    %p101 = scmp.ne.s32.totalorder %s90, %s91
    %p102 = scmp.eq.s32.totalorder %s14, 0
    %p103 = por %p101, %p102
    %p104 = scmp.ne.s32.totalorder %s90, %s91
    %p105 = scmp.eq.s32.totalorder %s15, 1
    %p106 = por %p104, %p105
    %p108 = scmp.ne.s32.totalorder %s91, %s107
    %p109 = scmp.eq.s32.totalorder %s15, 0
    %p110 = por %p108, %p109
    %p111 = scmp.le.s32.totalorder 1, %s9
    %p112 = scmp.lt.s32.totalorder %s9, 3
    %p113 = pnand %p111, %p112
    %p114 = pneg %p113
    // Predicated region
    $region9: #{se_layer.1} parent=5 // pred_check
      _
    $region10: #{se_layer.1} parent=5 // pred_check_branch
      %116 = sbr.rel (%p113) target = $region12
    $region11: #{se_layer.1} parent=5 // pred_region
      %s117 = ssub.s32 %s9, 1
      // Predicated region
      $region13: #{se_layer.1} parent=11 // pred_check
        %p118 = pneg %p56
      $region14: #{se_layer.1} parent=11 // pred_check_branch
        %120 = sbr.rel (%p118) target = $region16
      $region15: #{se_layer.1} parent=11 // pred_region
        _
      $region16: #{se_layer.1} parent=11 // pred_fallthru
        _
      // Predicated region
      $region17: #{se_layer.1} parent=11 // pred_check
        %p121 = pneg %p77
      $region18: #{se_layer.1} parent=11 // pred_check_branch
        %123 = sbr.rel (%p121) target = $region20
      $region19: #{se_layer.1} parent=11 // pred_region
        _
      $region20: #{se_layer.1} parent=11 // pred_fallthru
        _
    $region12: #{se_layer.1} parent=5 // pred_fallthru
      _
    %p124 = scmp.lt.s32.totalorder %s9, 2
    // Predicated region
    $region21: #{se_layer.1} parent=5 // pred_check
      %p125 = pneg %p124
    $region22: #{se_layer.1} parent=5 // pred_check_branch
      %127 = sbr.rel (%p125) target = $region24
    $region23: #{se_layer.1} parent=5 // pred_region
      // Predicated region
      $region25: #{se_layer.1} parent=23 // pred_check
        %p128 = pneg %p29
      $region26: #{se_layer.1} parent=23 // pred_check_branch
        %130 = sbr.rel (%p128) target = $region28
      $region27: #{se_layer.1} parent=23 // pred_region
        %p131 = scmp.lt.s32.totalorder %s9, 1
        %s132 = scalar_select %p131, %s9, 1
        %s133 = smul.addr %s132, 16
        %s134 = smul.addr %s133, 8
        %s135 = scalar_lea.vmem %s0, %s134
      $region28: #{se_layer.1} parent=23 // pred_fallthru
        _
    $region24: #{se_layer.1} parent=5 // pred_fallthru
      _
    %p136 = scmp.le.s32.totalorder 1, %s9
    %p137 = scmp.lt.s32.totalorder %s9, 3
    %p138 = pnand %p136, %p137
    %p139 = pneg %p138
    // Predicated region
    $region29: #{se_layer.1} parent=5 // pred_check
      _
    $region30: #{se_layer.1} parent=5 // pred_check_branch
      %141 = sbr.rel (%p138) target = $region32
    $region31: #{se_layer.1} parent=5 // pred_region
      %s142 = ssub.s32 %s9, 1
      %p143 = scmp.lt.s32.totalorder %s14, 1
      %s144 = scalar_select %p143, %s14, 1
      %s145 = smul.addr %s144, 16
      %s146 = smul.addr %s145, 8
      %s147 = scalar_lea.vmem %s0, %s146
      %p148 = pneg %p35
      %p149 = pneg %p32
      %p150 = pneg %p56
      %p151 = pneg %p53
      %p152 = pneg %p77
      %p153 = pneg %p74
      %p154 = pneg %p103
      %p155 = pneg %p100
      %p156 = scmp.lt.s32.totalorder %s14, 1
      %s157 = scalar_select %p156, %s14, 1
      %s158 = smul.addr %s157, 16
      %s159 = smul.addr %s158, 8
      %s160 = scalar_lea.vmem %s3, %s159
      %p161 = scmp.lt.s32.totalorder %s14, 1
      %s162 = scalar_select %p161, %s14, 1
      %s163 = smul.addr %s162, 16
      %s164 = smul.addr %s163, 8
      %s165 = scalar_lea.vmem %s0, %s164
      %p166 = scmp.lt.s32.totalorder %s14, 1
      %s167 = scalar_select %p166, %s14, 1
      %s168 = smul.addr %s167, 16
      %s169 = smul.addr %s168, 8
      %s170 = scalar_lea.vmem %s3, %s169
      %v171 = vld [vmem:[%s165] sm:$0xff]
      %v172 = vld [vmem:[%s165 + $0x8] sm:$0xff]
      %v173 = vld [vmem:[%s165 + $0x10] sm:$0xff]
      %v174 = vld [vmem:[%s165 + $0x18] sm:$0xff]
      %v175 = vld [vmem:[%s165 + $0x20] sm:$0xff]
      %v176 = vld [vmem:[%s165 + $0x28] sm:$0xff]
      %v177 = vld [vmem:[%s165 + $0x30] sm:$0xff]
      %v178 = vld [vmem:[%s165 + $0x38] sm:$0xff]
      %v179 = vld [vmem:[%s165 + $0x40] sm:$0xff]
      %v180 = vld [vmem:[%s165 + $0x48] sm:$0xff]
      %v181 = vld [vmem:[%s165 + $0x50] sm:$0xff]
      %v182 = vld [vmem:[%s165 + $0x58] sm:$0xff]
      %v183 = vld [vmem:[%s165 + $0x60] sm:$0xff]
      %v184 = vld [vmem:[%s165 + $0x68] sm:$0xff]
      %v185 = vld [vmem:[%s165 + $0x70] sm:$0xff]
      %v186 = vld [vmem:[%s165 + $0x78] sm:$0xff]
      %v187 = vadd.f32 %v171, %v172
      %188 = vadd.xlane.f32.xlu0 %v187
      %v189 = vpop.xlane.xlu0 %188
      %v190 = vadd.f32 %v173, %v174
      %191 = vadd.xlane.f32.xlu0 %v190
      %v192 = vpop.xlane.xlu0 %191
      %v193 = vadd.f32 %v175, %v176
      %194 = vadd.xlane.f32.xlu0 %v193
      %v195 = vpop.xlane.xlu0 %194
      %v196 = vadd.f32 %v177, %v178
      %197 = vadd.xlane.f32.xlu0 %v196
      %v198 = vpop.xlane.xlu0 %197
      %v199 = vadd.f32 %v179, %v180
      %200 = vadd.xlane.f32.xlu0 %v199
      %v201 = vpop.xlane.xlu0 %200
      %v202 = vadd.f32 %v181, %v182
      %203 = vadd.xlane.f32.xlu0 %v202
      %v204 = vpop.xlane.xlu0 %203
      %v205 = vadd.f32 %v183, %v184
      %206 = vadd.xlane.f32.xlu0 %v205
      %v207 = vpop.xlane.xlu0 %206
      %v208 = vadd.f32 %v185, %v186
      %209 = vadd.xlane.f32.xlu0 %v208
      %v210 = vpop.xlane.xlu0 %209
      %v211 = vmul.f32 %v189, 0.00390625
      %v212 = vmul.f32 %v192, 0.00390625
      %v213 = vmul.f32 %v195, 0.00390625
      %v214 = vmul.f32 %v198, 0.00390625
      %v215 = vmul.f32 %v201, 0.00390625
      %v216 = vmul.f32 %v204, 0.00390625
      %v217 = vmul.f32 %v207, 0.00390625
      %v218 = vmul.f32 %v210, 0.00390625
      %v219 = vld [vmem:[%s1] sm:$0xff]
      %v220 = vld [vmem:[%s1 + $0x8] sm:$0xff]
      %v221 = vld [vmem:[%s1 + $0x10] sm:$0xff]
      %v222 = vld [vmem:[%s1 + $0x18] sm:$0xff]
      %v223 = vld [vmem:[%s1 + $0x20] sm:$0xff]
      %v224 = vld [vmem:[%s1 + $0x28] sm:$0xff]
      %v225 = vld [vmem:[%s1 + $0x30] sm:$0xff]
      %v226 = vld [vmem:[%s1 + $0x38] sm:$0xff]
      %v235 = vlaneseq
      %v236 = vand.u32 %v235, 127
      %v237 = vlaneseq
      %v238 = vshrl.u32 %v237, 7
      %v239 = vsub.s32 %v236, %v238
      %v240 = vrot.slane %v211, %v239
      %v241 = vadd.s32 %v236, 4294967288
      %v242 = vlaneseq
      %v243 = vshrl.u32 %v242, 7
      %v244 = vsub.s32 %v241, %v243
      %v245 = vrot.slane %v212, %v244
      %vm246 = vcmask 130112
      %v247 = vsel %vm246, %v245, %v240
      %v248 = vadd.s32 %v236, 4294967280
      %v249 = vlaneseq
      %v250 = vshrl.u32 %v249, 7
      %v251 = vsub.s32 %v248, %v250
      %v252 = vrot.slane %v213, %v251
      %vm253 = vcmask 195712
      %v254 = vsel %vm253, %v252, %v247
      %v255 = vadd.s32 %v236, 4294967272
      %v256 = vlaneseq
      %v257 = vshrl.u32 %v256, 7
      %v258 = vsub.s32 %v255, %v257
      %v259 = vrot.slane %v214, %v258
      %vm260 = vcmask 261312
      %v261 = vsel %vm260, %v259, %v254
      %v262 = vadd.s32 %v236, 4294967264
      %v263 = vlaneseq
      %v264 = vshrl.u32 %v263, 7
      %v265 = vsub.s32 %v262, %v264
      %v266 = vrot.slane %v215, %v265
      %vm267 = vcmask 326912
      %v268 = vsel %vm267, %v266, %v261
      %v269 = vadd.s32 %v236, 4294967256
      %v270 = vlaneseq
      %v271 = vshrl.u32 %v270, 7
      %v272 = vsub.s32 %v269, %v271
      %v273 = vrot.slane %v216, %v272
      %vm274 = vcmask 392512
      %v275 = vsel %vm274, %v273, %v268
      %v276 = vadd.s32 %v236, 4294967248
      %v277 = vlaneseq
      %v278 = vshrl.u32 %v277, 7
      %v279 = vsub.s32 %v276, %v278
      %v280 = vrot.slane %v217, %v279
      %vm281 = vcmask 458112
      %v282 = vsel %vm281, %v280, %v275
      %v283 = vadd.s32 %v236, 4294967240
      %v284 = vlaneseq
      %v285 = vshrl.u32 %v284, 7
      %v286 = vsub.s32 %v283, %v285
      %v287 = vrot.slane %v218, %v286
      %vm288 = vcmask 523712
      %v289 = vsel %vm288, %v287, %v282
      %vm290 = vcmask 523264
      %v291 = vsel %vm290, %v289, 0
      %293 = vmatprep.subr.mxu0 0.0
      %294 = vmatpush1.msra.mxu0 0.0
      %295 = vmatprep.subr.mxu0 0.0
      %296 = vmatpush1.msra.mxu0 0.0
      %297 = vmatprep.subr.mxu0 0.0
      %298 = vmatpush1.msra.mxu0 0.0
      %299 = vmatprep.subr.mxu0 0.0
      %300 = vmatpush1.msra.mxu0 0.0
      %301 = vmatprep.subr.mxu0 0.0
      %302 = vmatpush1.msra.mxu0 0.0
      %303 = vmatprep.subr.mxu0 0.0
      %304 = vmatpush1.msra.mxu0 0.0
      %305 = vmatprep.subr.mxu0 0.0
      %306 = vmatpush1.msra.mxu0 0.0
      %307 = vmatprep.subr.mxu0 0.0
      %308 = vmatpush1.msra.mxu0 0.0
      %309 = vmatprep.subr.mxu0 0.0
      %310 = vmatpush1.msra.mxu0 %v226
      %311 = vmatprep.subr.mxu0 0.0
      %312 = vmatpush1.msra.mxu0 %v225
      %313 = vmatprep.subr.mxu0 0.0
      %314 = vmatpush1.msra.mxu0 %v224
      %315 = vmatprep.subr.mxu0 0.0
      %316 = vmatpush1.msra.mxu0 %v223
      %317 = vmatprep.subr.mxu0 0.0
      %318 = vmatpush1.msra.mxu0 %v222
      %319 = vmatprep.subr.mxu0 0.0
      %320 = vmatpush1.msra.mxu0 %v221
      %321 = vmatprep.subr.mxu0 0.0
      %322 = vmatpush1.msra.mxu0 %v220
      %323 = vmatprep.subr.mxu0 0.0
      %324 = vmatpush1.msra.mxu0 %v219
      %325 = vmatprep.subr.mxu0 0.0
      %326 = vmatpush2.msra.mxu0 0.0
      %327 = vmatprep.subr.mxu0 0.0
      %328 = vmatpush2.msra.mxu0 0.0
      %329 = vmatprep.subr.mxu0 0.0
      %330 = vmatpush2.msra.mxu0 0.0
      %331 = vmatprep.subr.mxu0 0.0
      %332 = vmatpush2.msra.mxu0 0.0
      %333 = vmatprep.subr.mxu0 0.0
      %334 = vmatpush2.msra.mxu0 0.0
      %335 = vmatprep.subr.mxu0 0.0
      %336 = vmatpush2.msra.mxu0 0.0
      %337 = vmatprep.subr.mxu0 0.0
      %338 = vmatpush2.msra.mxu0 0.0
      %339 = vmatprep.subr.mxu0 0.0
      %340 = vmatpush2.msra.mxu0 0.0
      %341 = vmatprep.subr.mxu0 0.0
      %342 = vmatpush2.msra.mxu0 0.0
      %343 = vmatprep.subr.mxu0 0.0
      %344 = vmatpush2.msra.mxu0 0.0
      %345 = vmatprep.subr.mxu0 0.0
      %346 = vmatpush2.msra.mxu0 0.0
      %347 = vmatprep.subr.mxu0 0.0
      %348 = vmatpush2.msra.mxu0 0.0
      %349 = vmatprep.subr.mxu0 0.0
      %350 = vmatpush2.msra.mxu0 0.0
      %351 = vmatprep.subr.mxu0 0.0
      %352 = vmatpush2.msra.mxu0 0.0
      %353 = vmatprep.subr.mxu0 0.0
      %354 = vmatpush2.msra.mxu0 0.0
      %355 = vmatprep.subr.mxu0 0.0
      %356 = vmatpush2.msra.mxu0 0.0
      %357 = vmatprep.mubr.f32.mxu0 0.0
      %358 = vmatmul.mubr.f32.gmra.mxu0 %v291
      %v359 = vpop.f32.mrf.mxu0
      %v360 = vadd.f32 0.0, %v359
      %v361 = vpop.f32.mrf.mxu0
      %362 = vdwg.mxu0
      %v363 = vmax.f32 %v360, 0.0
      %v364 = vld [vmem:[%s2] sm:$0xf]
      %vm365 = vcmask 31744
      %v367 = vsel %vm365, %v363, 0
      %vm369 = vcmask 1043456
      %v371 = vsel %vm369, %v364, 0
      %373 = vmatprep.subr.mxu0 0.0
      %374 = vmatpush1.msra.mxu0 0.0
      %375 = vmatprep.subr.mxu0 0.0
      %376 = vmatpush1.msra.mxu0 0.0
      %377 = vmatprep.subr.mxu0 0.0
      %378 = vmatpush1.msra.mxu0 0.0
      %379 = vmatprep.subr.mxu0 0.0
      %380 = vmatpush1.msra.mxu0 0.0
      %381 = vmatprep.subr.mxu0 0.0
      %382 = vmatpush1.msra.mxu0 0.0
      %383 = vmatprep.subr.mxu0 0.0
      %384 = vmatpush1.msra.mxu0 0.0
      %385 = vmatprep.subr.mxu0 0.0
      %386 = vmatpush1.msra.mxu0 0.0
      %387 = vmatprep.subr.mxu0 0.0
      %388 = vmatpush1.msra.mxu0 0.0
      %389 = vmatprep.subr.mxu0 0.0
      %390 = vmatpush1.msra.mxu0 0.0
      %391 = vmatprep.subr.mxu0 0.0
      %392 = vmatpush1.msra.mxu0 0.0
      %393 = vmatprep.subr.mxu0 0.0
      %394 = vmatpush1.msra.mxu0 0.0
      %395 = vmatprep.subr.mxu0 0.0
      %396 = vmatpush1.msra.mxu0 0.0
      %397 = vmatprep.subr.mxu0 0.0
      %398 = vmatpush1.msra.mxu0 0.0
      %399 = vmatprep.subr.mxu0 0.0
      %400 = vmatpush1.msra.mxu0 0.0
      %401 = vmatprep.subr.mxu0 0.0
      %402 = vmatpush1.msra.mxu0 0.0
      %403 = vmatprep.subr.mxu0 0.0
      %404 = vmatpush1.msra.mxu0 %v371
      %405 = vmatprep.subr.mxu0 0.0
      %406 = vmatpush2.msra.mxu0 0.0
      %407 = vmatprep.subr.mxu0 0.0
      %408 = vmatpush2.msra.mxu0 0.0
      %409 = vmatprep.subr.mxu0 0.0
      %410 = vmatpush2.msra.mxu0 0.0
      %411 = vmatprep.subr.mxu0 0.0
      %412 = vmatpush2.msra.mxu0 0.0
      %413 = vmatprep.subr.mxu0 0.0
      %414 = vmatpush2.msra.mxu0 0.0
      %415 = vmatprep.subr.mxu0 0.0
      %416 = vmatpush2.msra.mxu0 0.0
      %417 = vmatprep.subr.mxu0 0.0
      %418 = vmatpush2.msra.mxu0 0.0
      %419 = vmatprep.subr.mxu0 0.0
      %420 = vmatpush2.msra.mxu0 0.0
      %421 = vmatprep.subr.mxu0 0.0
      %422 = vmatpush2.msra.mxu0 0.0
      %423 = vmatprep.subr.mxu0 0.0
      %424 = vmatpush2.msra.mxu0 0.0
      %425 = vmatprep.subr.mxu0 0.0
      %426 = vmatpush2.msra.mxu0 0.0
      %427 = vmatprep.subr.mxu0 0.0
      %428 = vmatpush2.msra.mxu0 0.0
      %429 = vmatprep.subr.mxu0 0.0
      %430 = vmatpush2.msra.mxu0 0.0
      %431 = vmatprep.subr.mxu0 0.0
      %432 = vmatpush2.msra.mxu0 0.0
      %433 = vmatprep.subr.mxu0 0.0
      %434 = vmatpush2.msra.mxu0 0.0
      %435 = vmatprep.subr.mxu0 0.0
      %436 = vmatpush2.msra.mxu0 0.0
      %437 = vmatprep.mubr.f32.mxu0 0.0
      %438 = vmatmul.mubr.f32.gmra.mxu0 %v367
      %v439 = vpop.f32.mrf.mxu0
      %v440 = vadd.f32 0.0, %v439
      %v441 = vpop.f32.mrf.mxu0
      %442 = vdwg.mxu0
      %v443 = vxor.u32 %v440, 2147483648
      %v444 = vmul.f32 %v443, 1.442695
      %v445 = vpow.pop %v444
      %v446 = vadd.f32 %v445, 1.0
      %v447 = vrcp.pop %v446
      %v448 = vmul.f32 1.0, %v447
      %v449 = vlaneseq
      %v450 = vshrl.u32 %v449, 7
      %v451 = vsub.s32 0, %v450
      %v452 = vrot.slane %v448, %v451
      %454 = vbcast.lane.b32.xlu0 %v452, 256
      %v455 = vpop.permute.xlu0 %454
      %s457 = sor.u32 256, 8
      %458 = vbcast.lane.b32.xlu0 %v452, %s457
      %v459 = vpop.permute.xlu0 %458
      %s461 = sor.u32 256, 16
      %462 = vbcast.lane.b32.xlu0 %v452, %s461
      %v463 = vpop.permute.xlu0 %462
      %s465 = sor.u32 256, 24
      %466 = vbcast.lane.b32.xlu0 %v452, %s465
      %v467 = vpop.permute.xlu0 %466
      %s469 = sor.u32 256, 32
      %470 = vbcast.lane.b32.xlu0 %v452, %s469
      %v471 = vpop.permute.xlu0 %470
      %s473 = sor.u32 256, 40
      %474 = vbcast.lane.b32.xlu0 %v452, %s473
      %v475 = vpop.permute.xlu0 %474
      %s477 = sor.u32 256, 48
      %478 = vbcast.lane.b32.xlu0 %v452, %s477
      %v479 = vpop.permute.xlu0 %478
      %s481 = sor.u32 256, 56
      %482 = vbcast.lane.b32.xlu0 %v452, %s481
      %v483 = vpop.permute.xlu0 %482
      %v484 = vmul.f32 %v171, %v455
      %v485 = vmul.f32 %v172, %v455
      %v486 = vmul.f32 %v173, %v459
      %v487 = vmul.f32 %v174, %v459
      %v488 = vmul.f32 %v175, %v463
      %v489 = vmul.f32 %v176, %v463
      %v490 = vmul.f32 %v177, %v467
      %v491 = vmul.f32 %v178, %v467
      %v492 = vmul.f32 %v179, %v471
      %v493 = vmul.f32 %v180, %v471
      %v494 = vmul.f32 %v181, %v475
      %v495 = vmul.f32 %v182, %v475
      %v496 = vmul.f32 %v183, %v479
      %v497 = vmul.f32 %v184, %v479
      %v498 = vmul.f32 %v185, %v483
      %v499 = vmul.f32 %v186, %v483
      %500 = vst [vmem:[%s170] sm:$0xff] %v484
      %501 = vst [vmem:[%s170 + $0x8] sm:$0xff] %v485
      %502 = vst [vmem:[%s170 + $0x10] sm:$0xff] %v486
      %503 = vst [vmem:[%s170 + $0x18] sm:$0xff] %v487
      %504 = vst [vmem:[%s170 + $0x20] sm:$0xff] %v488
      %505 = vst [vmem:[%s170 + $0x28] sm:$0xff] %v489
      %506 = vst [vmem:[%s170 + $0x30] sm:$0xff] %v490
      %507 = vst [vmem:[%s170 + $0x38] sm:$0xff] %v491
      %508 = vst [vmem:[%s170 + $0x40] sm:$0xff] %v492
      %509 = vst [vmem:[%s170 + $0x48] sm:$0xff] %v493
      %510 = vst [vmem:[%s170 + $0x50] sm:$0xff] %v494
      %511 = vst [vmem:[%s170 + $0x58] sm:$0xff] %v495
      %512 = vst [vmem:[%s170 + $0x60] sm:$0xff] %v496
      %513 = vst [vmem:[%s170 + $0x68] sm:$0xff] %v497
      %514 = vst [vmem:[%s170 + $0x70] sm:$0xff] %v498
      %515 = vst [vmem:[%s170 + $0x78] sm:$0xff] %v499
      %p516 = scmp.lt.s32.totalorder %s14, 1
      %s517 = scalar_select %p516, %s14, 1
      %s518 = smul.addr %s517, 16
      %s519 = smul.addr %s518, 8
      %s520 = scalar_lea.vmem %s3, %s519
      // Predicated region
      $region33: #{se_layer.1} parent=31 // pred_check
        %p521 = pneg %p100
      $region34: #{se_layer.1} parent=31 // pred_check_branch
        %523 = sbr.rel (%p521) target = $region36
      $region35: #{se_layer.1} parent=31 // pred_region
        _
      $region36: #{se_layer.1} parent=31 // pred_fallthru
        _
    $region32: #{se_layer.1} parent=5 // pred_fallthru
      _
    %p524 = scmp.le.s32.totalorder 2, %s9
    // Predicated region
    $region37: #{se_layer.1} parent=5 // pred_check
      %p525 = pneg %p524
    $region38: #{se_layer.1} parent=5 // pred_check_branch
      %527 = sbr.rel (%p525) target = $region40
    $region39: #{se_layer.1} parent=5 // pred_region
      %s528 = ssub.s32 %s9, 2
      // Predicated region
      $region41: #{se_layer.1} parent=39 // pred_check
        %p529 = pneg %p106
      $region42: #{se_layer.1} parent=39 // pred_check_branch
        %531 = sbr.rel (%p529) target = $region44
      $region43: #{se_layer.1} parent=39 // pred_region
        %p532 = scmp.lt.s32.totalorder %s15, 1
        %s533 = scalar_select %p532, %s15, 1
        %s534 = smul.addr %s533, 16
        %s535 = smul.addr %s534, 8
        %s536 = scalar_lea.vmem %s3, %s535
      $region44: #{se_layer.1} parent=39 // pred_fallthru
        _
    $region40: #{se_layer.1} parent=5 // pred_fallthru
      _
  $region6: #{se_layer.1} parent=0 // loop_footer
    %s13 = sadd.s32 1, %s9
  $region7: #{se_layer.1} parent=0 // loop_footer_branch
    %8 = sbr.rel target = $region3
  $region8: #{se_layer.1} parent=0 // loop_exit
    _

</llo_original>
